<compile_context>
chip_gen: v5e
topology: v5e:2x2
jax: 0.10.0
libtpu: 0.0.40
codegen_flags: <defaults>
</compile_context>

<pallas_src>
import functools

import jax
import jax.numpy as jnp
from jax.experimental import pallas as pl
from jax.experimental.pallas import tpu as pltpu


# ----------------------------------------------------------------------------
# Kernel: one grid step == one timestep of the stacked LSTM + FC + log-softmax
# ----------------------------------------------------------------------------
def _seq_lstm_kernel(n_layers, hidden_size, *refs):
    """refs layout (inputs, then outputs):

      refs[0]              x_ref    (B, D_in0)    f32  current timestep (T axis squeezed)
      refs[1]              hc0_ref  (B, 2*L*H)    f32  initial state, per-layer [h_l | c_l]
      refs[2 + 3*l + 0]    wih_ref  (D_in_l, 4H)  bf16
      refs[2 + 3*l + 1]    whh_ref  (H, 4H)       bf16
      refs[2 + 3*l + 2]    b_ref    (1, 4H)       f32  (b_ih + b_hh)
      refs[2 + 3*L + 0]    fcw_ref  (H, O)        bf16
      refs[2 + 3*L + 1]    fcb_ref  (1, O)        f32
      refs[2 + 3*L + 2]    out_ref  (B, O)        f32  log-probs for this step
      refs[2 + 3*L + 3]    hc_ref   (B, 2*L*H)    f32  carried state (revisited output block)
    """
    H = hidden_size
    L = n_layers
    x_ref, hc0_ref = refs[0], refs[1]
    fcw_ref = refs[2 + 3 * L]
    fcb_ref = refs[3 + 3 * L]
    out_ref = refs[4 + 3 * L]
    hc_ref = refs[5 + 3 * L]

    t = pl.program_id(0)

    # State block is resident in VMEM across the whole time grid; seed it once.
    @pl.when(t == 0)
    def _():
        hc_ref[...] = hc0_ref[...]

    layer_in = x_ref[...]                              # (B, D_in) f32
    for l in range(L):                                 # static Python loop
        wih_ref = refs[2 + 3 * l]
        whh_ref = refs[3 + 3 * l]
        b_ref = refs[4 + 3 * l]

        h_prev = hc_ref[:, (2 * l) * H:(2 * l + 1) * H]      # (B, H)
        c_prev = hc_ref[:, (2 * l + 1) * H:(2 * l + 2) * H]  # (B, H)

        # Two MXU pushes, no lane concat; accumulate in f32.
        gates = (
            jnp.dot(layer_in.astype(jnp.bfloat16), wih_ref[...],
                    preferred_element_type=jnp.float32)
            + jnp.dot(h_prev.astype(jnp.bfloat16), whh_ref[...],
                      preferred_element_type=jnp.float32)
            + b_ref[...]
        )                                              # (B, 4H) f32

        if 4 * H <= 128:
            # Entire gate block is a single vreg: full-vreg EUP ops are optimal.
            sig = jax.nn.sigmoid(gates)
            tan = jnp.tanh(gates)
            i_g = sig[:, 0 * H:1 * H]
            f_g = sig[:, 1 * H:2 * H]
            g_g = tan[:, 2 * H:3 * H]
            o_g = sig[:, 3 * H:4 * H]
        else:
            # Slice first: 3H columns of sigmoid + H of tanh (vs 8H full-vreg).
            if_g = jax.nn.sigmoid(gates[:, 0:2 * H])
            i_g = if_g[:, 0:H]
            f_g = if_g[:, H:2 * H]
            g_g = jnp.tanh(gates[:, 2 * H:3 * H])
            o_g = jax.nn.sigmoid(gates[:, 3 * H:4 * H])

        c_new = f_g * c_prev + i_g * g_g
        h_new = o_g * jnp.tanh(c_new)

        # Write back per layer; layer l+1 only reads its own (untouched) columns.
        hc_ref[:, (2 * l) * H:(2 * l + 1) * H] = h_new
        hc_ref[:, (2 * l + 1) * H:(2 * l + 2) * H] = c_new
        layer_in = h_new                               # seq_len step output == h_new

    # Linear + log-softmax over the feature axis (dim=1).
    logits = (
        jnp.dot(layer_in.astype(jnp.bfloat16), fcw_ref[...],
                preferred_element_type=jnp.float32)
        + fcb_ref[...]
    )
    m = jnp.max(logits, axis=1, keepdims=True)
    shifted = logits - m
    lse = jnp.log(jnp.sum(jnp.exp(shifted), axis=1, keepdims=True))
    out_ref[...] = (shifted - lse).astype(out_ref.dtype)


# ----------------------------------------------------------------------------
# pallas_call driver: T timesteps in one launch, weights resident, state carried
# ----------------------------------------------------------------------------
def _seq_lstm_pallas(xs, hc0, params, n_layers):
    """xs: (T, B, D_in) f32; hc0: (B, 2*L*H) packed f32.

    Returns (log_probs (T, B, O) f32, hc_final (B, 2*L*H) f32).
    """
    T, B, D_in = xs.shape
    H = params["fc_w"].shape[0]
    O = params["fc_w"].shape[1]
    L = n_layers

    const = lambda t: (0, 0)                           # weight / state blocks: DMA once
    args = [xs, hc0]
    in_specs = [
        pl.BlockSpec((None, B, D_in), lambda t: (t, 0, 0)),   # current timestep
        pl.BlockSpec((B, 2 * L * H), const),                  # initial state
    ]
    for l in range(L):
        w_ih, w_hh, b = params["lstm"][l]
        args += [w_ih, w_hh, b]
        in_specs += [
            pl.BlockSpec(w_ih.shape, const),
            pl.BlockSpec(w_hh.shape, const),
            pl.BlockSpec(b.shape, const),
        ]
    args += [params["fc_w"], params["fc_b"]]
    in_specs += [
        pl.BlockSpec(params["fc_w"].shape, const),
        pl.BlockSpec(params["fc_b"].shape, const),
    ]

    kernel = functools.partial(_seq_lstm_kernel, n_layers, H)
    out, hc = pl.pallas_call(
        kernel,
        grid=(T,),
        out_shape=(
            jax.ShapeDtypeStruct((T, B, O), jnp.float32),
            jax.ShapeDtypeStruct((B, 2 * L * H), jnp.float32),
        ),
        in_specs=in_specs,
        out_specs=(
            pl.BlockSpec((None, B, O), lambda t: (t, 0, 0)),  # per-step log-probs
            pl.BlockSpec((B, 2 * L * H), const),              # carried state
        ),
        compiler_params=pltpu.CompilerParams(
            dimension_semantics=("arbitrary",),     # sequential: state carry across t
            vmem_limit_bytes=32 * 1024 * 1024,      # explicit: v5e scoped default is 16 MiB
        ),
    )(*args)
    return out, hc


# ----------------------------------------------------------------------------
# State packing helpers: (L, B, H) h/c  <->  lane-dense (B, 2*L*H) slab
# ----------------------------------------------------------------------------
def pack_state(h, c):
    L, B, H = h.shape
    return jnp.transpose(jnp.stack([h, c], axis=1), (2, 0, 1, 3)).reshape(
        B, 2 * L * H)


def unpack_state(hc, n_layers, hidden_size):
    B = hc.shape[0]
    hc = hc.reshape(B, n_layers, 2, hidden_size)
    h = jnp.transpose(hc[:, :, 0, :], (1, 0, 2))
    c = jnp.transpose(hc[:, :, 1, :], (1, 0, 2))
    return h, c


# ----------------------------------------------------------------------------
# Public wrappers
# ----------------------------------------------------------------------------
@functools.partial(jax.jit, static_argnames=("n_layers",))
def seq_lstm_forward(x, h0, c0, params, n_layers):
    """PyTorch-faithful single step. x: (B, D_in); h0/c0: (L, B, H).

    Returns (log_probs (B, O), (h_n, c_n)).
    """
    H = h0.shape[-1]
    hc0 = pack_state(h0, c0)
    out, hc = _seq_lstm_pallas(x[None], hc0, params, n_layers)
    h_n, c_n = unpack_state(hc, n_layers, H)
    return out[0], (h_n, c_n)


@functools.partial(jax.jit, static_argnames=("n_layers",))
def seq_lstm_forward_sequence(xs, hc0, params, n_layers):
    """Decode-loop form: T steps in one kernel launch; state stays packed.

    xs: (T, B, D_in); hc0: (B, 2*L*H) packed. Returns ((T, B, O), hc_packed).
    """
    return _seq_lstm_pallas(xs, hc0, params, n_layers)


# ----------------------------------------------------------------------------
# Parameter init (mimics PyTorch uniform(-1/sqrt(H), 1/sqrt(H)))
# ----------------------------------------------------------------------------
def init_params(key, input_size, hidden_size, output_size, n_layers):
    params = {"lstm": []}
    bound = 1.0 / jnp.sqrt(jnp.float32(hidden_size))
    for l in range(n_layers):
        d_in = input_size if l == 0 else hidden_size
        key, k1, k2, k3, k4 = jax.random.split(key, 5)
        w_ih = jax.random.uniform(k1, (d_in, 4 * hidden_size), jnp.float32,
                                  -bound, bound).astype(jnp.bfloat16)
        w_hh = jax.random.uniform(k2, (hidden_size, 4 * hidden_size), jnp.float32,
                                  -bound, bound).astype(jnp.bfloat16)
        b_ih = jax.random.uniform(k3, (1, 4 * hidden_size), jnp.float32,
                                  -bound, bound)
        b_hh = jax.random.uniform(k4, (1, 4 * hidden_size), jnp.float32,
                                  -bound, bound)
        params["lstm"].append((w_ih, w_hh, b_ih + b_hh))
    key, k1, k2 = jax.random.split(key, 3)
    params["fc_w"] = jax.random.uniform(
        k1, (hidden_size, output_size), jnp.float32, -bound, bound
    ).astype(jnp.bfloat16)
    params["fc_b"] = jax.random.uniform(k2, (1, output_size), jnp.float32,
                                        -bound, bound)
    # TODO(synk): nn.Embedding(input_size, hidden_size) exists in __init__ but is
    # unused in forward(), so it is intentionally not instantiated here.
    return params


# ----------------------------------------------------------------------------
# Pure-JAX reference (same bf16-quantized weights, f32 math) for verification
# ----------------------------------------------------------------------------
def reference_step(x, h, c, params, n_layers):
    H = h.shape[-1]
    layer_in = x
    h_out, c_out = [], []
    for l in range(n_layers):
        w_ih, w_hh, b = params["lstm"][l]
        gates = (layer_in @ w_ih.astype(jnp.float32)
                 + h[l] @ w_hh.astype(jnp.float32) + b)
        i_g = jax.nn.sigmoid(gates[:, 0 * H:1 * H])
        f_g = jax.nn.sigmoid(gates[:, 1 * H:2 * H])
        g_g = jnp.tanh(gates[:, 2 * H:3 * H])
        o_g = jax.nn.sigmoid(gates[:, 3 * H:4 * H])
        c_new = f_g * c[l] + i_g * g_g
        h_new = o_g * jnp.tanh(c_new)
        h_out.append(h_new)
        c_out.append(c_new)
        layer_in = h_new
    logits = layer_in @ params["fc_w"].astype(jnp.float32) + params["fc_b"]
    out = jax.nn.log_softmax(logits, axis=1)
    return out, jnp.stack(h_out, 0), jnp.stack(c_out, 0)


if __name__ == "__main__":
    batch = 8
    input_size = 16
    hidden_size = 32
    output_size = 8
    n_layers = 2
    seq_steps = 8

    key = jax.random.PRNGKey(0)
    key, k_x, k_xs = jax.random.split(key, 3)
    x = jax.random.normal(k_x, (batch, input_size), jnp.float32)
    xs = jax.random.normal(k_xs, (seq_steps, batch, input_size), jnp.float32)

    # init_hidden(batch): zeros
    h0 = jnp.zeros((n_layers, batch, hidden_size), jnp.float32)
    c0 = jnp.zeros((n_layers, batch, hidden_size), jnp.float32)

    params = init_params(key, input_size, hidden_size, output_size, n_layers)

    # ---- single-step call (faithful to SeqLSTM.forward) ----
    out, (h_n, c_n) = seq_lstm_forward(x, h0, c0, params, n_layers)
    jax.block_until_ready((out, h_n, c_n))

    assert out.shape == (batch, output_size)
    assert h_n.shape == (n_layers, batch, hidden_size)
    assert c_n.shape == (n_layers, batch, hidden_size)
    assert jnp.allclose(jnp.exp(out).sum(axis=1), 1.0, atol=1e-5)

    ref_out, ref_h, ref_c = reference_step(x, h0, c0, params, n_layers)
    assert jnp.allclose(out, ref_out, atol=5e-2, rtol=5e-2)
    assert jnp.allclose(h_n, ref_h, atol=5e-2, rtol=5e-2)
    assert jnp.allclose(c_n, ref_c, atol=5e-2, rtol=5e-2)

    # ---- multi-step call: T steps in one launch, state kept packed ----
    hc0 = pack_state(h0, c0)
    outs, hc_final = seq_lstm_forward_sequence(xs, hc0, params, n_layers)
    jax.block_until_ready((outs, hc_final))

    # Reference: step the pure-JAX cell T times.
    h_ref, c_ref = h0, c0
    ref_outs = []
    for t in range(seq_steps):
        o_t, h_ref, c_ref = reference_step(xs[t], h_ref, c_ref, params, n_layers)
        ref_outs.append(o_t)
    ref_outs = jnp.stack(ref_outs, 0)
    h_fin, c_fin = unpack_state(hc_final, n_layers, hidden_size)

    assert outs.shape == (seq_steps, batch, output_size)
    assert jnp.allclose(outs, ref_outs, atol=5e-2, rtol=5e-2)
    assert jnp.allclose(h_fin, h_ref, atol=5e-2, rtol=5e-2)
    assert jnp.allclose(c_fin, c_ref, atol=5e-2, rtol=5e-2)

    print("KERNEL_OK")
</pallas_src>

<mosaic_0001>
module attributes {stable_mosaic.version = 11 : i64} {
  func.func @_seq_lstm_kernel(%arg0: i32, %arg1: memref<1x8x16xf32, #tpu.memory_space<vmem>>, %arg2: memref<8x128xf32, #tpu.memory_space<vmem>>, %arg3: memref<16x128xbf16, #tpu.memory_space<vmem>>, %arg4: memref<32x128xbf16, #tpu.memory_space<vmem>>, %arg5: memref<1x128xf32, #tpu.memory_space<vmem>>, %arg6: memref<32x128xbf16, #tpu.memory_space<vmem>>, %arg7: memref<32x128xbf16, #tpu.memory_space<vmem>>, %arg8: memref<1x128xf32, #tpu.memory_space<vmem>>, %arg9: memref<32x8xbf16, #tpu.memory_space<vmem>>, %arg10: memref<1x8xf32, #tpu.memory_space<vmem>>, %arg11: memref<1x8x8xf32, #tpu.memory_space<vmem>>, %arg12: memref<8x128xf32, #tpu.memory_space<vmem>>) attributes {dimension_semantics = [#tpu.dimension_semantics<arbitrary>], iteration_bounds = array<i64: 1>, scalar_prefetch = 0 : i64, scratch_operands = 0 : i64, tpu.core_type = #tpu.core_type<tc>, window_params = [{transform_indices = @transform_0, window_bounds = array<i64: 1, 8, 16>}, {pipeline_mode = #tpu.pipeline_mode<synchronous>, transform_indices = @transform_1, window_bounds = array<i64: 8, 128>}, {pipeline_mode = #tpu.pipeline_mode<synchronous>, transform_indices = @transform_2, window_bounds = array<i64: 16, 128>}, {pipeline_mode = #tpu.pipeline_mode<synchronous>, transform_indices = @transform_3, window_bounds = array<i64: 32, 128>}, {pipeline_mode = #tpu.pipeline_mode<synchronous>, transform_indices = @transform_4, window_bounds = array<i64: 1, 128>}, {pipeline_mode = #tpu.pipeline_mode<synchronous>, transform_indices = @transform_5, window_bounds = array<i64: 32, 128>}, {pipeline_mode = #tpu.pipeline_mode<synchronous>, transform_indices = @transform_6, window_bounds = array<i64: 32, 128>}, {pipeline_mode = #tpu.pipeline_mode<synchronous>, transform_indices = @transform_7, window_bounds = array<i64: 1, 128>}, {pipeline_mode = #tpu.pipeline_mode<synchronous>, transform_indices = @transform_8, window_bounds = array<i64: 32, 8>}, {pipeline_mode = #tpu.pipeline_mode<synchronous>, transform_indices = @transform_9, window_bounds = array<i64: 1, 8>}, {transform_indices = @transform_10, window_bounds = array<i64: 1, 8, 8>}, {pipeline_mode = #tpu.pipeline_mode<synchronous>, transform_indices = @transform_11, window_bounds = array<i64: 8, 128>}]} {
    %c0_i32 = arith.constant 0 : i32
    %0 = arith.cmpi eq, %arg0, %c0_i32 : i32
    %1 = arith.extui %0 : i1 to i32
    %c0_i32_0 = arith.constant 0 : i32
    %2 = arith.cmpi ne, %1, %c0_i32_0 : i32
    scf.if %2 {
      %c0_43 = arith.constant 0 : index
      %c0_44 = arith.constant 0 : index
      %82 = vector.load %arg2[%c0_43, %c0_44] : memref<8x128xf32, #tpu.memory_space<vmem>>, vector<8x128xf32>
      %c0_45 = arith.constant 0 : index
      %c0_46 = arith.constant 0 : index
      %83 = vector.load %arg12[%c0_45, %c0_46] : memref<8x128xf32, #tpu.memory_space<vmem>>, vector<8x128xf32>
      tpu.vector_store %arg12[%c0_45, %c0_46], %82 {strides = array<i32>} : memref<8x128xf32, #tpu.memory_space<vmem>>, vector<8x128xf32>,
    } else {
    }
    %c0 = arith.constant 0 : index
    %c0_1 = arith.constant 0 : index
    %c0_2 = arith.constant 0 : index
    %3 = vector.load %arg1[%c0, %c0_1, %c0_2] : memref<1x8x16xf32, #tpu.memory_space<vmem>>, vector<1x8x16xf32>
    %4 = vector.shape_cast %3 : vector<1x8x16xf32> to vector<8x16xf32>
    %c0_3 = arith.constant 0 : index
    %c0_4 = arith.constant 0 : index
    %5 = vector.load %arg12[%c0_3, %c0_4] : memref<8x128xf32, #tpu.memory_space<vmem>>, vector<8x32xf32>
    %c0_5 = arith.constant 0 : index
    %c32 = arith.constant 32 : index
    %6 = vector.load %arg12[%c0_5, %c32] : memref<8x128xf32, #tpu.memory_space<vmem>>, vector<8x32xf32>
    %7 = arith.truncf %4 : vector<8x16xf32> to vector<8x16xbf16>
    %c0_6 = arith.constant 0 : index
    %c0_7 = arith.constant 0 : index
    %8 = vector.load %arg3[%c0_6, %c0_7] : memref<16x128xbf16, #tpu.memory_space<vmem>>, vector<16x128xbf16>
    %cst = arith.constant dense<0.000000e+00> : vector<8x128xf32>
    %9 = tpu.matmul %7, %8, %cst {dimension_numbers = #tpu.dot_dimension_numbers<[1], [0], [0], [1], [0, 0, 1, 1], [], []>} : vector<8x16xbf16>, vector<16x128xbf16>, vector<8x128xf32> -> vector<8x128xf32>
    %10 = arith.truncf %5 : vector<8x32xf32> to vector<8x32xbf16>
    %c0_8 = arith.constant 0 : index
    %c0_9 = arith.constant 0 : index
    %11 = vector.load %arg4[%c0_8, %c0_9] : memref<32x128xbf16, #tpu.memory_space<vmem>>, vector<32x128xbf16>
    %cst_10 = arith.constant dense<0.000000e+00> : vector<8x128xf32>
    %12 = tpu.matmul %10, %11, %cst_10 {dimension_numbers = #tpu.dot_dimension_numbers<[1], [0], [0], [1], [0, 0, 1, 1], [], []>} : vector<8x32xbf16>, vector<32x128xbf16>, vector<8x128xf32> -> vector<8x128xf32>
    %13 = arith.addf %9, %12 : vector<8x128xf32>
    %c0_11 = arith.constant 0 : index
    %c0_12 = arith.constant 0 : index
    %14 = vector.load %arg5[%c0_11, %c0_12] : memref<1x128xf32, #tpu.memory_space<vmem>>, vector<1x128xf32>
    %15 = vector.broadcast %14 : vector<1x128xf32> to vector<8x128xf32>
    %16 = arith.addf %13, %15 : vector<8x128xf32>
    %17 = arith.negf %16 : vector<8x128xf32>
    %18 = math.exp %17 : vector<8x128xf32>
    %cst_13 = arith.constant 1.000000e+00 : f32
    %19 = vector.broadcast %cst_13 : f32 to vector<8x128xf32>
    %20 = arith.addf %19, %18 : vector<8x128xf32>
    %21 = arith.divf %19, %20 : vector<8x128xf32>
    %22 = math.tanh %16 : vector<8x128xf32>
    %23 = vector.extract_strided_slice %21 {offsets = [0, 0], sizes = [8, 32], strides = [1, 1]} : vector<8x128xf32> to vector<8x32xf32>
    %24 = vector.extract_strided_slice %21 {offsets = [0, 32], sizes = [8, 32], strides = [1, 1]} : vector<8x128xf32> to vector<8x32xf32>
    %25 = vector.extract_strided_slice %22 {offsets = [0, 64], sizes = [8, 32], strides = [1, 1]} : vector<8x128xf32> to vector<8x32xf32>
    %26 = vector.extract_strided_slice %21 {offsets = [0, 96], sizes = [8, 32], strides = [1, 1]} : vector<8x128xf32> to vector<8x32xf32>
    %27 = arith.mulf %24, %6 : vector<8x32xf32>
    %28 = arith.mulf %23, %25 : vector<8x32xf32>
    %29 = arith.addf %27, %28 : vector<8x32xf32>
    %30 = math.tanh %29 : vector<8x32xf32>
    %31 = arith.mulf %26, %30 : vector<8x32xf32>
    %c0_14 = arith.constant 0 : index
    %c0_15 = arith.constant 0 : index
    %32 = vector.load %arg12[%c0_14, %c0_15] : memref<8x128xf32, #tpu.memory_space<vmem>>, vector<8x32xf32>
    tpu.vector_store %arg12[%c0_14, %c0_15], %31 {strides = array<i32>} : memref<8x128xf32, #tpu.memory_space<vmem>>, vector<8x32xf32>,
    %c0_16 = arith.constant 0 : index
    %c32_17 = arith.constant 32 : index
    %33 = vector.load %arg12[%c0_16, %c32_17] : memref<8x128xf32, #tpu.memory_space<vmem>>, vector<8x32xf32>
    tpu.vector_store %arg12[%c0_16, %c32_17], %29 {strides = array<i32>} : memref<8x128xf32, #tpu.memory_space<vmem>>, vector<8x32xf32>,
    %c0_18 = arith.constant 0 : index
    %c64 = arith.constant 64 : index
    %34 = vector.load %arg12[%c0_18, %c64] : memref<8x128xf32, #tpu.memory_space<vmem>>, vector<8x32xf32>
    %c0_19 = arith.constant 0 : index
    %c96 = arith.constant 96 : index
    %35 = vector.load %arg12[%c0_19, %c96] : memref<8x128xf32, #tpu.memory_space<vmem>>, vector<8x32xf32>
    %36 = arith.truncf %31 : vector<8x32xf32> to vector<8x32xbf16>
    %c0_20 = arith.constant 0 : index
    %c0_21 = arith.constant 0 : index
    %37 = vector.load %arg6[%c0_20, %c0_21] : memref<32x128xbf16, #tpu.memory_space<vmem>>, vector<32x128xbf16>
    %cst_22 = arith.constant dense<0.000000e+00> : vector<8x128xf32>
    %38 = tpu.matmul %36, %37, %cst_22 {dimension_numbers = #tpu.dot_dimension_numbers<[1], [0], [0], [1], [0, 0, 1, 1], [], []>} : vector<8x32xbf16>, vector<32x128xbf16>, vector<8x128xf32> -> vector<8x128xf32>
    %39 = arith.truncf %34 : vector<8x32xf32> to vector<8x32xbf16>
    %c0_23 = arith.constant 0 : index
    %c0_24 = arith.constant 0 : index
    %40 = vector.load %arg7[%c0_23, %c0_24] : memref<32x128xbf16, #tpu.memory_space<vmem>>, vector<32x128xbf16>
    %cst_25 = arith.constant dense<0.000000e+00> : vector<8x128xf32>
    %41 = tpu.matmul %39, %40, %cst_25 {dimension_numbers = #tpu.dot_dimension_numbers<[1], [0], [0], [1], [0, 0, 1, 1], [], []>} : vector<8x32xbf16>, vector<32x128xbf16>, vector<8x128xf32> -> vector<8x128xf32>
    %42 = arith.addf %38, %41 : vector<8x128xf32>
    %c0_26 = arith.constant 0 : index
    %c0_27 = arith.constant 0 : index
    %43 = vector.load %arg8[%c0_26, %c0_27] : memref<1x128xf32, #tpu.memory_space<vmem>>, vector<1x128xf32>
    %44 = vector.broadcast %43 : vector<1x128xf32> to vector<8x128xf32>
    %45 = arith.addf %42, %44 : vector<8x128xf32>
    %46 = arith.negf %45 : vector<8x128xf32>
    %47 = math.exp %46 : vector<8x128xf32>
    %cst_28 = arith.constant 1.000000e+00 : f32
    %48 = vector.broadcast %cst_28 : f32 to vector<8x128xf32>
    %49 = arith.addf %48, %47 : vector<8x128xf32>
    %50 = arith.divf %48, %49 : vector<8x128xf32>
    %51 = math.tanh %45 : vector<8x128xf32>
    %52 = vector.extract_strided_slice %50 {offsets = [0, 0], sizes = [8, 32], strides = [1, 1]} : vector<8x128xf32> to vector<8x32xf32>
    %53 = vector.extract_strided_slice %50 {offsets = [0, 32], sizes = [8, 32], strides = [1, 1]} : vector<8x128xf32> to vector<8x32xf32>
    %54 = vector.extract_strided_slice %51 {offsets = [0, 64], sizes = [8, 32], strides = [1, 1]} : vector<8x128xf32> to vector<8x32xf32>
    %55 = vector.extract_strided_slice %50 {offsets = [0, 96], sizes = [8, 32], strides = [1, 1]} : vector<8x128xf32> to vector<8x32xf32>
    %56 = arith.mulf %53, %35 : vector<8x32xf32>
    %57 = arith.mulf %52, %54 : vector<8x32xf32>
    %58 = arith.addf %56, %57 : vector<8x32xf32>
    %59 = math.tanh %58 : vector<8x32xf32>
    %60 = arith.mulf %55, %59 : vector<8x32xf32>
    %c0_29 = arith.constant 0 : index
    %c64_30 = arith.constant 64 : index
    %61 = vector.load %arg12[%c0_29, %c64_30] : memref<8x128xf32, #tpu.memory_space<vmem>>, vector<8x32xf32>
    tpu.vector_store %arg12[%c0_29, %c64_30], %60 {strides = array<i32>} : memref<8x128xf32, #tpu.memory_space<vmem>>, vector<8x32xf32>,
    %c0_31 = arith.constant 0 : index
    %c96_32 = arith.constant 96 : index
    %62 = vector.load %arg12[%c0_31, %c96_32] : memref<8x128xf32, #tpu.memory_space<vmem>>, vector<8x32xf32>
    tpu.vector_store %arg12[%c0_31, %c96_32], %58 {strides = array<i32>} : memref<8x128xf32, #tpu.memory_space<vmem>>, vector<8x32xf32>,
    %63 = arith.truncf %60 : vector<8x32xf32> to vector<8x32xbf16>
    %c0_33 = arith.constant 0 : index
    %c0_34 = arith.constant 0 : index
    %64 = vector.load %arg9[%c0_33, %c0_34] : memref<32x8xbf16, #tpu.memory_space<vmem>>, vector<32x8xbf16>
    %cst_35 = arith.constant dense<0.000000e+00> : vector<8x8xf32>
    %65 = tpu.matmul %63, %64, %cst_35 {dimension_numbers = #tpu.dot_dimension_numbers<[1], [0], [0], [1], [0, 0, 1, 1], [], []>} : vector<8x32xbf16>, vector<32x8xbf16>, vector<8x8xf32> -> vector<8x8xf32>
    %c0_36 = arith.constant 0 : index
    %c0_37 = arith.constant 0 : index
    %66 = vector.load %arg10[%c0_36, %c0_37] : memref<1x8xf32, #tpu.memory_space<vmem>>, vector<1x8xf32>
    %67 = vector.broadcast %66 : vector<1x8xf32> to vector<8x8xf32>
    %68 = arith.addf %65, %67 : vector<8x8xf32>
    %cst_38 = arith.constant dense<0xFF800000> : vector<8xf32>
    %69 = vector.multi_reduction <maximumf>, %68, %cst_38 [1] : vector<8x8xf32> to vector<8xf32>
    %70 = vector.shape_cast %69 : vector<8xf32> to vector<8x1xf32>
    %71 = vector.broadcast %70 : vector<8x1xf32> to vector<8x8xf32>
    %72 = arith.subf %68, %71 : vector<8x8xf32>
    %73 = math.exp %72 : vector<8x8xf32>
    %cst_39 = arith.constant dense<0.000000e+00> : vector<8xf32>
    %74 = vector.multi_reduction <add>, %73, %cst_39 [1] : vector<8x8xf32> to vector<8xf32>
    %75 = vector.shape_cast %74 : vector<8xf32> to vector<8x1xf32>
    %76 = math.log %75 : vector<8x1xf32>
    %77 = vector.broadcast %76 : vector<8x1xf32> to vector<8x8xf32>
    %78 = arith.subf %72, %77 : vector<8x8xf32>
    %c0_40 = arith.constant 0 : index
    %c0_41 = arith.constant 0 : index
    %c0_42 = arith.constant 0 : index
    %79 = vector.load %arg11[%c0_40, %c0_41, %c0_42] : memref<1x8x8xf32, #tpu.memory_space<vmem>>, vector<1x8x8xf32>
    %80 = vector.shape_cast %79 : vector<1x8x8xf32> to vector<8x8xf32>
    %81 = vector.shape_cast %78 : vector<8x8xf32> to vector<1x8x8xf32>
    tpu.vector_store %arg11[%c0_40, %c0_41, %c0_42], %81 {strides = array<i32>} : memref<1x8x8xf32, #tpu.memory_space<vmem>>, vector<1x8x8xf32>,
    return
  }
  func.func @transform_0(%arg0: i32) -> (i32, i32, i32) {
    %c0_i32 = arith.constant 0 : i32
    %c0_i32_0 = arith.constant 0 : i32
    %c0_i32_1 = arith.constant 0 : i32
    return %arg0, %c0_i32, %c0_i32_0 : i32, i32, i32
  }
  func.func @transform_1(%arg0: i32) -> (i32, i32) {
    %c0_i32 = arith.constant 0 : i32
    %c0_i32_0 = arith.constant 0 : i32
    %c0_i32_1 = arith.constant 0 : i32
    return %c0_i32, %c0_i32_0 : i32, i32
  }
  func.func @transform_2(%arg0: i32) -> (i32, i32) {
    %c0_i32 = arith.constant 0 : i32
    %c0_i32_0 = arith.constant 0 : i32
    %c0_i32_1 = arith.constant 0 : i32
    return %c0_i32, %c0_i32_0 : i32, i32
  }
  func.func @transform_3(%arg0: i32) -> (i32, i32) {
    %c0_i32 = arith.constant 0 : i32
    %c0_i32_0 = arith.constant 0 : i32
    %c0_i32_1 = arith.constant 0 : i32
    return %c0_i32, %c0_i32_0 : i32, i32
  }
  func.func @transform_4(%arg0: i32) -> (i32, i32) {
    %c0_i32 = arith.constant 0 : i32
    %c0_i32_0 = arith.constant 0 : i32
    %c0_i32_1 = arith.constant 0 : i32
    return %c0_i32, %c0_i32_0 : i32, i32
  }
  func.func @transform_5(%arg0: i32) -> (i32, i32) {
    %c0_i32 = arith.constant 0 : i32
    %c0_i32_0 = arith.constant 0 : i32
    %c0_i32_1 = arith.constant 0 : i32
    return %c0_i32, %c0_i32_0 : i32, i32
  }
  func.func @transform_6(%arg0: i32) -> (i32, i32) {
    %c0_i32 = arith.constant 0 : i32
    %c0_i32_0 = arith.constant 0 : i32
    %c0_i32_1 = arith.constant 0 : i32
    return %c0_i32, %c0_i32_0 : i32, i32
  }
  func.func @transform_7(%arg0: i32) -> (i32, i32) {
    %c0_i32 = arith.constant 0 : i32
    %c0_i32_0 = arith.constant 0 : i32
    %c0_i32_1 = arith.constant 0 : i32
    return %c0_i32, %c0_i32_0 : i32, i32
  }
  func.func @transform_8(%arg0: i32) -> (i32, i32) {
    %c0_i32 = arith.constant 0 : i32
    %c0_i32_0 = arith.constant 0 : i32
    %c0_i32_1 = arith.constant 0 : i32
    return %c0_i32, %c0_i32_0 : i32, i32
  }
  func.func @transform_9(%arg0: i32) -> (i32, i32) {
    %c0_i32 = arith.constant 0 : i32
    %c0_i32_0 = arith.constant 0 : i32
    %c0_i32_1 = arith.constant 0 : i32
    return %c0_i32, %c0_i32_0 : i32, i32
  }
  func.func @transform_10(%arg0: i32) -> (i32, i32, i32) {
    %c0_i32 = arith.constant 0 : i32
    %c0_i32_0 = arith.constant 0 : i32
    %c0_i32_1 = arith.constant 0 : i32
    return %arg0, %c0_i32, %c0_i32_0 : i32, i32, i32
  }
  func.func @transform_11(%arg0: i32) -> (i32, i32) {
    %c0_i32 = arith.constant 0 : i32
    %c0_i32_0 = arith.constant 0 : i32
    %c0_i32_1 = arith.constant 0 : i32
    return %c0_i32, %c0_i32_0 : i32, i32
  }
}

</mosaic_0001>

<llo_original>
// kernel: seq_lstm_forward.1
$region0: #{seq_lstm_forward.1}
  #allocation0 [shape = 'u32[]', space=smem, size = 0x4, offset = 0x4, fixed_abs, tag = 'smem constant byte address 0x4 - core index']
  #allocation1 [shape = 'u32[72,128]{1,0:T(1,128)}', space=vmem, size = 0x9000, scoped, tag = 'internal scratch']
  %s0 = inlined_call_operand.vmem [shape: f32[1,8,16], index: 0, kind: input, shape index: {}]
  %s1 = inlined_call_operand.vmem [shape: f32[8,128], index: 1, kind: input, shape index: {}]
  %s2 = inlined_call_operand.vmem [shape: bf16[16,128], index: 2, kind: input, shape index: {}]
  %s3 = inlined_call_operand.vmem [shape: bf16[32,128], index: 3, kind: input, shape index: {}]
  %s4 = inlined_call_operand.vmem [shape: f32[1,128], index: 4, kind: input, shape index: {}]
  %s5 = inlined_call_operand.vmem [shape: bf16[32,128], index: 5, kind: input, shape index: {}]
  %s6 = inlined_call_operand.vmem [shape: bf16[32,128], index: 6, kind: input, shape index: {}]
  %s7 = inlined_call_operand.vmem [shape: f32[1,128], index: 7, kind: input, shape index: {}]
  %s8 = inlined_call_operand.vmem [shape: bf16[32,8], index: 8, kind: input, shape index: {}]
  %s9 = inlined_call_operand.vmem [shape: f32[1,8], index: 9, kind: input, shape index: {}]
  %s10 = inlined_call_operand.hbm [shape: f32[1,8,8], index: 10, kind: output, shape index: {0}]
  %s11 = inlined_call_operand.vmem [shape: f32[8,128], index: 11, kind: output, shape index: {1}]
  %12 = xla_tuple %s10, %s11
  %s13 = sld [smem:[#allocation0]]
  $region62: #{seq_lstm_forward.1} parent=0
    _
  %s15 = ssub.s32 1, %s13
  %s16 = scalar_select 0, %s15, %s13
  $region1: #{seq_lstm_forward.1} parent=0
    #allocation2 [shape = 'u8[4096]{0}', space=vmem, size = 0x1000, scoped, tag = 'output window, operand 0, single buffered']
    #allocation3 [shape = 's32[1]{0}', space=sflag, size = 0x4, scoped, tag = 'scoped memory for seq_lstm_forward.1']
    %17 = vsyncpa [#allocation3], 0
    // Predicated region
    $region2: #{seq_lstm_forward.1} parent=1 // pred_check
      _
    $region3: #{seq_lstm_forward.1} parent=1 // pred_check_branch
      %19 = sbr.rel (0) target = $region5
    $region4: #{seq_lstm_forward.1} parent=1 // pred_region
      _
    $region5: #{seq_lstm_forward.1} parent=1 // pred_fallthru
      _
    // Predicated region
    $region6: #{seq_lstm_forward.1} parent=1 // pred_check
      _
    $region7: #{seq_lstm_forward.1} parent=1 // pred_check_branch
      %21 = sbr.rel (0) target = $region9
    $region8: #{seq_lstm_forward.1} parent=1 // pred_region
      _
    $region9: #{seq_lstm_forward.1} parent=1 // pred_fallthru
      _
    // Predicated region
    $region10: #{seq_lstm_forward.1} parent=1 // pred_check
      _
    $region11: #{seq_lstm_forward.1} parent=1 // pred_check_branch
      %23 = sbr.rel (0) target = $region13
    $region12: #{seq_lstm_forward.1} parent=1 // pred_region
      _
    $region13: #{seq_lstm_forward.1} parent=1 // pred_fallthru
      _
    // Predicated region
    $region14: #{seq_lstm_forward.1} parent=1 // pred_check
      _
    $region15: #{seq_lstm_forward.1} parent=1 // pred_check_branch
      %25 = sbr.rel (0) target = $region17
    $region16: #{seq_lstm_forward.1} parent=1 // pred_region
      _
    $region17: #{seq_lstm_forward.1} parent=1 // pred_fallthru
      _
    // Predicated region
    $region18: #{seq_lstm_forward.1} parent=1 // pred_check
      _
    $region19: #{seq_lstm_forward.1} parent=1 // pred_check_branch
      %27 = sbr.rel (0) target = $region21
    $region20: #{seq_lstm_forward.1} parent=1 // pred_region
      _
    $region21: #{seq_lstm_forward.1} parent=1 // pred_fallthru
      _
    // Predicated region
    $region22: #{seq_lstm_forward.1} parent=1 // pred_check
      _
    $region23: #{seq_lstm_forward.1} parent=1 // pred_check_branch
      %29 = sbr.rel (0) target = $region25
    $region24: #{seq_lstm_forward.1} parent=1 // pred_region
      _
    $region25: #{seq_lstm_forward.1} parent=1 // pred_fallthru
      _
    // Predicated region
    $region26: #{seq_lstm_forward.1} parent=1 // pred_check
      _
    $region27: #{seq_lstm_forward.1} parent=1 // pred_check_branch
      %31 = sbr.rel (0) target = $region29
    $region28: #{seq_lstm_forward.1} parent=1 // pred_region
      _
    $region29: #{seq_lstm_forward.1} parent=1 // pred_fallthru
      _
    // Predicated region
    $region30: #{seq_lstm_forward.1} parent=1 // pred_check
      _
    $region31: #{seq_lstm_forward.1} parent=1 // pred_check_branch
      %33 = sbr.rel (0) target = $region33
    $region32: #{seq_lstm_forward.1} parent=1 // pred_region
      _
    $region33: #{seq_lstm_forward.1} parent=1 // pred_fallthru
      _
    // Predicated region
    $region34: #{seq_lstm_forward.1} parent=1 // pred_check
      _
    $region35: #{seq_lstm_forward.1} parent=1 // pred_check_branch
      %35 = sbr.rel (0) target = $region37
    $region36: #{seq_lstm_forward.1} parent=1 // pred_region
      _
    $region37: #{seq_lstm_forward.1} parent=1 // pred_fallthru
      _
    // Predicated region
    $region38: #{seq_lstm_forward.1} parent=1 // pred_check
      _
    $region39: #{seq_lstm_forward.1} parent=1 // pred_check_branch
      %37 = sbr.rel (0) target = $region41
    $region40: #{seq_lstm_forward.1} parent=1 // pred_region
      _
    $region41: #{seq_lstm_forward.1} parent=1 // pred_fallthru
      _
    %p39 = scmp.eq.s32.totalorder 0, 0
    // Predicated region
    $region42: #{seq_lstm_forward.1} parent=1 // pred_check
      %p40 = pneg %p39
    $region43: #{seq_lstm_forward.1} parent=1 // pred_check_branch
      %42 = sbr.rel (%p40) target = $region45
    $region44: #{seq_lstm_forward.1} parent=1 // pred_region
      %v43 = vld [vmem:[%s1] sm:$0xff]
      %44 = vst [vmem:[%s11] sm:$0xff] %v43
    $region45: #{seq_lstm_forward.1} parent=1 // pred_fallthru
      _
    %v45 = vld [vmem:[%s0] sm:$0xff]
    %v46 = vld [vmem:[%s11] sm:$0xff]
    %v47 = vpack.c.bf16 %v45, %v45
    %v48 = vld [vmem:[%s2] sm:$0xf]
    %v49 = vld [vmem:[%s2 + $0x4] sm:$0xf]
    %v50 = vpack.c.bf16 %v46, %v46
    %v51 = vld [vmem:[%s3] sm:$0xf]
    %v52 = vld [vmem:[%s3 + $0x4] sm:$0xf]
    %v53 = vld [vmem:[%s3 + $0x8] sm:$0xf]
    %v54 = vld [vmem:[%s3 + $0xc] sm:$0xf]
    %v59 = vunpack.c.l.b16 %v51
    %v60 = vunpack.c.l.b16 %v52
    %v61 = vunpack.c.l.b16 %v53
    %v62 = vunpack.c.l.b16 %v54
    %v63 = vpack.c.b16 %v60, %v59
    %v64 = vpack.c.b16 %v62, %v61
    %vm67 = vcmask 261120
    %v69 = vsel %vm67, %v50, 0
    %71 = vmatpush.bf16.msra.mxu0 0
    %72 = vmatpush.bf16.msra.mxu0 0
    %73 = vmatpush.bf16.msra.mxu0 0
    %74 = vmatpush.bf16.msra.mxu0 0
    %75 = vmatpush.bf16.msra.mxu0 0
    %76 = vmatpush.bf16.msra.mxu0 0
    %77 = vmatpush.bf16.msra.mxu0 %v64
    %78 = vmatpush.bf16.msra.mxu0 %v63
    %79 = vmatmul.bf16.gmra.mxu0 %v69
    %v80 = vpop.f32.mrf.mxu0
    %v81 = vadd.f32 0.0, %v80
    %v82 = vpop.f32.mrf.mxu0
    %83 = vdwg.mxu0
    %v86 = vunpack.c.l.b16 %v48
    %v87 = vunpack.c.l.b16 %v49
    %v88 = vpack.c.b16 %v87, %v86
    %vm90 = vcmask 130048
    %v92 = vsel %vm90, %v47, 0
    %94 = vmatpush.bf16.msra.mxu0 0
    %95 = vmatpush.bf16.msra.mxu0 0
    %96 = vmatpush.bf16.msra.mxu0 0
    %97 = vmatpush.bf16.msra.mxu0 0
    %98 = vmatpush.bf16.msra.mxu0 0
    %99 = vmatpush.bf16.msra.mxu0 0
    %100 = vmatpush.bf16.msra.mxu0 0
    %101 = vmatpush.bf16.msra.mxu0 %v88
    %102 = vmatmul.bf16.gmra.mxu0 %v92
    %v103 = vpop.f32.mrf.mxu0
    %v104 = vadd.f32 %v81, %v103
    %v105 = vpop.f32.mrf.mxu0
    %106 = vdwg.mxu0
    %v107 = vld [vmem:[%s4] sm:$0x1]
    %v109 = vperm.slane %v107, 0
    %v111 = vadd.f32 %v104, %v109
    %v112 = vxor.u32 %v111, 2147483648
    %v113 = vmul.f32 %v112, 1.442695
    %v114 = vpow.pop %v113
    %v115 = vadd.f32 %v114, 1.0
    %v116 = vrcp.pop %v115
    %v117 = vmul.f32 %v115, %v116
    %v118 = vsub.f32 1.0, %v117
    %v119 = vmul.f32 %v116, %v118
    %v120 = vadd.f32 %v116, %v119
    %vm121 = vweird.f32 %v115
    %vm122 = vweird.f32 %v116
    %vm123 = vmor %vm121, %vm122
    %v124 = vsel %vm123, %v116, %v120
    %v125 = vand.u32 2147483647, %v115
    %vm126 = vcmp.eq.f32.partialorder %v125, 8.507059e+37
    %v127 = vand.u32 %v115, 2147483648
    %v128 = vor.u32 1.1754944e-38, %v127
    %v129 = vsel %vm126, %v128, %v124
    %v130 = vmul.f32 1.0, %v129
    %v131 = vtanh.pop %v111
    %v132 = vmul.f32 %v130, %v46
    %134 = vrot.lane.b32.xlu0 %v131, 64
    %v135 = vpop.permute.xlu0 %134
    %v137 = vmul.f32 %v130, %v135
    %139 = vrot.lane.b32.xlu0 %v137, 32
    %v140 = vpop.permute.xlu0 %139
    %v142 = vadd.f32 %v132, %v140
    %v143 = vtanh.pop %v142
    %145 = vrot.lane.b32.xlu0 %v143, 64
    %v146 = vpop.permute.xlu0 %145
    %v148 = vmul.f32 %v130, %v146
    %150 = vrot.lane.b32.xlu0 %v148, 32
    %v151 = vpop.permute.xlu0 %150
    %153 = vst.msk [vmem:[%s11] sm:$0xff] %vm67, %v151
    %vm154 = vcmask 523520
    %155 = vst.msk [vmem:[%s11] sm:$0xff] %vm154, %v142
    %v156 = vld [vmem:[%s11] sm:$0xff]
    %v157 = vpack.c.bf16 %v148, %v148
    %v158 = vld [vmem:[%s5] sm:$0xf]
    %v159 = vld [vmem:[%s5 + $0x4] sm:$0xf]
    %v160 = vld [vmem:[%s5 + $0x8] sm:$0xf]
    %v161 = vld [vmem:[%s5 + $0xc] sm:$0xf]
    %v162 = vpack.c.bf16 %v156, %v156
    %v163 = vld [vmem:[%s6] sm:$0xf]
    %v164 = vld [vmem:[%s6 + $0x4] sm:$0xf]
    %v165 = vld [vmem:[%s6 + $0x8] sm:$0xf]
    %v166 = vld [vmem:[%s6 + $0xc] sm:$0xf]
    %168 = vrot.lane.b32.xlu0 %v162, 64
    %v169 = vpop.permute.xlu0 %168
    %v174 = vunpack.c.l.b16 %v163
    %v175 = vunpack.c.l.b16 %v164
    %v176 = vunpack.c.l.b16 %v165
    %v177 = vunpack.c.l.b16 %v166
    %v178 = vpack.c.b16 %v175, %v174
    %v179 = vpack.c.b16 %v177, %v176
    %v183 = vsel %vm67, %v169, 0
    %185 = vmatpush.bf16.msra.mxu0 0
    %186 = vmatpush.bf16.msra.mxu0 0
    %187 = vmatpush.bf16.msra.mxu0 0
    %188 = vmatpush.bf16.msra.mxu0 0
    %189 = vmatpush.bf16.msra.mxu0 0
    %190 = vmatpush.bf16.msra.mxu0 0
    %191 = vmatpush.bf16.msra.mxu0 %v179
    %192 = vmatpush.bf16.msra.mxu0 %v178
    %193 = vmatmul.bf16.gmra.mxu0 %v183
    %v194 = vpop.f32.mrf.mxu0
    %v195 = vadd.f32 0.0, %v194
    %v196 = vpop.f32.mrf.mxu0
    %197 = vdwg.mxu0
    %199 = vrot.lane.b32.xlu0 %v157, 32
    %v200 = vpop.permute.xlu0 %199
    %v205 = vunpack.c.l.b16 %v158
    %v206 = vunpack.c.l.b16 %v159
    %v207 = vunpack.c.l.b16 %v160
    %v208 = vunpack.c.l.b16 %v161
    %v209 = vpack.c.b16 %v206, %v205
    %v210 = vpack.c.b16 %v208, %v207
    %v214 = vsel %vm67, %v200, 0
    %216 = vmatpush.bf16.msra.mxu0 0
    %217 = vmatpush.bf16.msra.mxu0 0
    %218 = vmatpush.bf16.msra.mxu0 0
    %219 = vmatpush.bf16.msra.mxu0 0
    %220 = vmatpush.bf16.msra.mxu0 0
    %221 = vmatpush.bf16.msra.mxu0 0
    %222 = vmatpush.bf16.msra.mxu0 %v210
    %223 = vmatpush.bf16.msra.mxu0 %v209
    %224 = vmatmul.bf16.gmra.mxu0 %v214
    %v225 = vpop.f32.mrf.mxu0
    %v226 = vadd.f32 %v195, %v225
    %v227 = vpop.f32.mrf.mxu0
    %228 = vdwg.mxu0
    %v229 = vld [vmem:[%s7] sm:$0x1]
    %v231 = vperm.slane %v229, 0
    %v233 = vadd.f32 %v226, %v231
    %v234 = vxor.u32 %v233, 2147483648
    %v235 = vmul.f32 %v234, 1.442695
    %v236 = vpow.pop %v235
    %v237 = vadd.f32 %v236, 1.0
    %v238 = vrcp.pop %v237
    %v239 = vmul.f32 %v237, %v238
    %v240 = vsub.f32 1.0, %v239
    %v241 = vmul.f32 %v238, %v240
    %v242 = vadd.f32 %v238, %v241
    %vm243 = vweird.f32 %v237
    %vm244 = vweird.f32 %v238
    %vm245 = vmor %vm243, %vm244
    %v246 = vsel %vm245, %v238, %v242
    %v247 = vand.u32 2147483647, %v237
    %vm248 = vcmp.eq.f32.partialorder %v247, 8.507059e+37
    %v249 = vand.u32 %v237, 2147483648
    %v250 = vor.u32 1.1754944e-38, %v249
    %v251 = vsel %vm248, %v250, %v246
    %v252 = vmul.f32 1.0, %v251
    %v253 = vtanh.pop %v233
    %255 = vrot.lane.b32.xlu0 %v156, 64
    %v256 = vpop.permute.xlu0 %255
    %v258 = vmul.f32 %v252, %v256
    %260 = vrot.lane.b32.xlu0 %v253, 64
    %v261 = vpop.permute.xlu0 %260
    %v263 = vmul.f32 %v252, %v261
    %265 = vrot.lane.b32.xlu0 %v263, 32
    %v266 = vpop.permute.xlu0 %265
    %v268 = vadd.f32 %v258, %v266
    %v269 = vtanh.pop %v268
    %271 = vrot.lane.b32.xlu0 %v269, 64
    %v272 = vpop.permute.xlu0 %271
    %v274 = vmul.f32 %v252, %v272
    %276 = vrot.lane.b32.xlu0 %v274, 96
    %v277 = vpop.permute.xlu0 %276
    %vm279 = vcmask 785920
    %280 = vst.msk [vmem:[%s11] sm:$0xff] %vm279, %v277
    %282 = vrot.lane.b32.xlu0 %v268, 64
    %v283 = vpop.permute.xlu0 %282
    %vm285 = vcmask 1048320
    %286 = vst.msk [vmem:[%s11] sm:$0xff] %vm285, %v283
    %v287 = vpack.c.bf16 %v274, %v274
    %v288 = vld [vmem:[%s8] sm:$0xf]
    %v289 = vld [vmem:[%s8 + $0x4] sm:$0xf]
    %v290 = vld [vmem:[%s8 + $0x8] sm:$0xf]
    %v291 = vld [vmem:[%s8 + $0xc] sm:$0xf]
    %v292 = vld [vmem:[%s9] sm:$0x1]
    %v294 = vperm.slane %v292, 0
    %297 = vrot.lane.b32.xlu0 %v287, 32
    %v298 = vpop.permute.xlu0 %297
    %v303 = vunpack.c.l.b16 %v288
    %v304 = vunpack.c.l.b16 %v289
    %v305 = vunpack.c.l.b16 %v290
    %v306 = vunpack.c.l.b16 %v291
    %v307 = vpack.c.b16 %v304, %v303
    %v308 = vpack.c.b16 %v306, %v305
    %v312 = vsel %vm67, %v298, 0
    %314 = vmatpush.bf16.msra.mxu0 0
    %315 = vmatpush.bf16.msra.mxu0 0
    %316 = vmatpush.bf16.msra.mxu0 0
    %317 = vmatpush.bf16.msra.mxu0 0
    %318 = vmatpush.bf16.msra.mxu0 0
    %319 = vmatpush.bf16.msra.mxu0 0
    %320 = vmatpush.bf16.msra.mxu0 %v308
    %321 = vmatpush.bf16.msra.mxu0 %v307
    %322 = vmatmul.bf16.gmra.mxu0 %v312
    %v323 = vpop.f32.mrf.mxu0
    %v324 = vadd.f32 %v294, %v323
    %v325 = vpop.f32.mrf.mxu0
    %326 = vdwg.mxu0
    %vm327 = vcmask 64512
    %v328 = vsel %vm327, %v324, -inf
    %329 = vmax.xlane.f32.xlu0 %v328
    %v330 = vpop.xlane.xlu0 %329
    %v331 = vsub.f32 %v324, %v330
    %v332 = vmul.f32 %v331, 1.442695
    %v333 = vpow.pop %v332
    %v334 = vsel %vm327, %v333, 0.0
    %335 = vadd.xlane.f32.xlu0 %v334
    %v336 = vpop.xlane.xlu0 %335
    %v337 = vlog2.pop %v336
    %v338 = vmul.f32 %v337, 0.6931472
    %v339 = vsub.f32 %v331, %v338
    %340 = vst.msk [vmem:[#allocation2] sm:$0xff] %vm327, %v339
    // Predicated region
    $region46: #{seq_lstm_forward.1} parent=1 // pred_check
      _
    $region47: #{seq_lstm_forward.1} parent=1 // pred_check_branch
      %342 = sbr.rel (0) target = $region49
    $region48: #{seq_lstm_forward.1} parent=1 // pred_region
      %344 = vsyncadd [#allocation3], 0
      %s346 = sshll.u32 [#allocation2], 4
      %s347 = int_to_ptr.vmem [resolvable:$true] %s346
      %s348 = sshll.u32 %s10, 4
      %s349 = int_to_ptr.hbm [resolvable:$true] %s348
      %351 = dma.vmem_to_hbm [thread:$0]  %s347, 128, %s349, [#allocation3]
    $region49: #{seq_lstm_forward.1} parent=1 // pred_fallthru
      _
    // Predicated region
    $region50: #{seq_lstm_forward.1} parent=1 // pred_check
      _
    $region51: #{seq_lstm_forward.1} parent=1 // pred_check_branch
      %353 = sbr.rel (0) target = $region53
    $region52: #{seq_lstm_forward.1} parent=1 // pred_region
      _
    $region53: #{seq_lstm_forward.1} parent=1 // pred_fallthru
      _
    // Predicated region
    $region54: #{seq_lstm_forward.1} parent=1 // pred_check
      _
    $region55: #{seq_lstm_forward.1} parent=1 // pred_check_branch
      %355 = sbr.rel (0) target = $region57
    $region56: #{seq_lstm_forward.1} parent=1 // pred_region
      %357 = dma.done [#allocation3], 128
    $region57: #{seq_lstm_forward.1} parent=1 // pred_fallthru
      _
    // Predicated region
    $region58: #{seq_lstm_forward.1} parent=1 // pred_check
      _
    $region59: #{seq_lstm_forward.1} parent=1 // pred_check_branch
      %359 = sbr.rel (0) target = $region61
    $region60: #{seq_lstm_forward.1} parent=1 // pred_region
      _
    $region61: #{seq_lstm_forward.1} parent=1 // pred_fallthru
      _
    %360 = vsyncpa [#allocation3], 1

</llo_original>
